<compile_context>
chip_gen: v7x
topology: tpu7x:2x2x1
jax: 0.10.0
libtpu: 0.0.40
codegen_flags: <defaults>
</compile_context>

<pallas_src>
import functools

import jax
import jax.numpy as jnp
import numpy as np
from jax.experimental import pallas as pl
from jax.experimental.pallas import tpu as pltpu


def _relation_kernel(f_a_ref, logwg_ref, wkqv_ref, bkqv_ref, out_ref, *,
                     heads, dim_k, approx_recip):
    """One grid step handles `heads` relation heads.

    f_a_ref:   (N, D_a)                 shared appearance features
    logwg_ref: (heads, N, N)            precomputed log(clip(relu(WG(pos)),1e-6))
    wkqv_ref:  (D_a, 3*heads*dim_k)     fused [K-all | Q-all | V-all] weight
    bkqv_ref:  (1, 1, 3*heads*dim_k)    fused bias (Q part pre-scaled)
    out_ref:   (N, heads*dim_k)         lane-dense output slab
    """
    f_a = f_a_ref[...]                                             # (N, D_a)

    # One lane-dense MXU matmul for every head's K/Q/V at once.
    kqv = (jnp.dot(f_a, wkqv_ref[...],
                   preferred_element_type=jnp.float32)
           + bkqv_ref[0])                                          # (N, 3*H*dim_k) f32

    hk = heads * dim_k
    k_slab = kqv[:, :hk]                                           # (N, H*dim_k)
    q_slab = kqv[:, hk:2 * hk]
    v_slab = kqv[:, 2 * hk:]

    outs = []
    for h in range(heads):                                         # static unroll
        sl = slice(h * dim_k, (h + 1) * dim_k)
        w_k = k_slab[:, sl]                                        # (N, dim_k)
        w_q = q_slab[:, sl]
        w_v = v_slab[:, sl]

        # w_a[i, j] = sum_c w_k[i, c] * w_q[j, c]  (1/sqrt(dim_k) already folded
        # into the Q columns).  Contract last dims of both operands.
        # TODO(synk): if a large-N tiled path inherits this, check with
        # pl.lower_as_mlir that no explicit vxpose of w_q is materialized.
        w_a = jax.lax.dot_general(w_k, w_q, (((1,), (1,)), ((), ())),
                                  preferred_element_type=jnp.float32)   # (N, N)

        logits = logwg_ref[h] + w_a                                # (N, N)
        m = jnp.max(logits, axis=1, keepdims=True)
        e = jnp.exp(logits - m)
        denom = jnp.sum(e, axis=1, keepdims=True)
        if approx_recip:
            w_mn = e * pl.reciprocal(denom, approx=True)           # EUP slot
        else:
            w_mn = e / denom                                       # exact (f32 parity)

        outs.append(jnp.dot(w_mn, w_v, preferred_element_type=jnp.float32))

    # Single lane-dense store of the whole (N, H*dim_k) slab.
    out_ref[...] = jnp.concatenate(outs, axis=1).astype(out_ref.dtype)


def _default_head_groups(Nr):
    """2 grid steps on v7x (2 TensorCores/chip); 1 step elsewhere."""
    try:
        kind = jax.devices()[0].device_kind.lower()
    except Exception:  # pragma: no cover - defensive
        kind = ""
    if Nr % 2 == 0 and Nr >= 2 and "v7" in kind:
        return 2
    return 1


def relation_unit_forward_batched(f_a, position_embedding, params, *,
                                  dim_k, dim_g, use_bf16=True,
                                  head_groups=None):
    """Batched RelationUnit forward: Nr heads share f_a / position_embedding.

    f_a:                (N, D_a)
    position_embedding: (N*N, dim_g)
    params (PyTorch Linear layout, stacked over the head axis):
      WG_w (Nr,1,dim_g), WG_b (Nr,1),
      WK_w/WQ_w/WV_w (Nr,dim_k,D_a), WK_b/WQ_b/WV_b (Nr,dim_k)
    returns: (Nr, N, dim_k) float32
    """
    N, D_a = f_a.shape
    Nr = params["WK_w"].shape[0]

    if head_groups is None:
        head_groups = _default_head_groups(Nr)
    assert Nr % head_groups == 0, (Nr, head_groups)
    H = Nr // head_groups                       # heads per grid step

    # ---- geometric term, precomputed in the wrapper (one small XLA matmul).
    # log_w_g[h, i, j] = log(clip(relu(pos[i*N+j] . wg_w[h] + wg_b[h]), 1e-6))
    pos_flat = jnp.asarray(position_embedding, jnp.float32).reshape(N * N, dim_g)
    wg_all = params["WG_w"].reshape(Nr, dim_g).astype(jnp.float32).T    # (dim_g, Nr)
    wg_b = params["WG_b"].reshape(1, Nr).astype(jnp.float32)
    g = jnp.maximum(pos_flat @ wg_all + wg_b, 0.0)                      # (N*N, Nr)
    log_w_g = jnp.log(jnp.maximum(g, 1e-6)).T.reshape(Nr, N, N)         # (Nr, N, N)

    # ---- fused, pre-transposed KQV weight; 1/sqrt(dim_k) folded into Q.
    scale = np.float32(1.0 / np.sqrt(dim_k))
    wk = params["WK_w"].transpose(0, 2, 1).astype(jnp.float32)          # (Nr, D_a, dim_k)
    wq = params["WQ_w"].transpose(0, 2, 1).astype(jnp.float32) * scale
    wv = params["WV_w"].transpose(0, 2, 1).astype(jnp.float32)
    bk = params["WK_b"].astype(jnp.float32)                             # (Nr, dim_k)
    bq = params["WQ_b"].astype(jnp.float32) * scale
    bv = params["WV_b"].astype(jnp.float32)

    def group_cols(w):      # (Nr, D_a, dim_k) -> (head_groups, D_a, H*dim_k)
        return w.reshape(head_groups, H, D_a, dim_k).transpose(0, 2, 1, 3) \
                .reshape(head_groups, D_a, H * dim_k)

    def group_bias(b):      # (Nr, dim_k) -> (head_groups, H*dim_k)
        return b.reshape(head_groups, H * dim_k)

    # Columns per group ordered [all K | all Q | all V] (vreg-aligned slabs).
    wkqv_g = jnp.concatenate([group_cols(wk), group_cols(wq), group_cols(wv)],
                             axis=-1)                                   # (G, D_a, 3*H*dim_k)
    wkqv2 = wkqv_g.transpose(1, 0, 2).reshape(D_a, head_groups * 3 * H * dim_k)
    bkqv = jnp.concatenate([group_bias(bk), group_bias(bq), group_bias(bv)],
                           axis=-1).reshape(head_groups, 1, 3 * H * dim_k)

    mm_dtype = jnp.bfloat16 if use_bf16 else jnp.float32
    f_a_mm = f_a.astype(mm_dtype)
    wkqv_mm = wkqv2.astype(mm_dtype)

    # Whole per-step problem lives in VMEM (tiny at these sizes).
    # TODO(synk): add a row-tiled (query-block) path over N once N grows; size
    # the tiles against v7x's 64 MiB physical / 32 MiB scoped-default VMEM with
    # input double-buffering (2x) accounted for, and set vmem_limit_bytes.
    out2 = pl.pallas_call(
        functools.partial(_relation_kernel, heads=H, dim_k=dim_k,
                          approx_recip=use_bf16),
        out_shape=jax.ShapeDtypeStruct((N, Nr * dim_k), jnp.float32),
        grid=(head_groups,),
        in_specs=[
            pl.BlockSpec((N, D_a), lambda gi: (0, 0)),                  # shared f_a
            pl.BlockSpec((H, N, N), lambda gi: (gi, 0, 0)),             # per-group log geo
            pl.BlockSpec((D_a, 3 * H * dim_k), lambda gi: (0, gi)),     # per-group fused W
            pl.BlockSpec((1, 1, 3 * H * dim_k), lambda gi: (gi, 0, 0)), # per-group fused bias
        ],
        out_specs=pl.BlockSpec((N, H * dim_k), lambda gi: (0, gi)),     # lane-dense slab
        compiler_params=pltpu.CompilerParams(
            dimension_semantics=("parallel",)),     # head-groups shard across TCs on v7x
    )(f_a_mm, log_w_g, wkqv_mm, bkqv)

    # (N, Nr*dim_k) lane-dense slab -> (Nr, N, dim_k)
    return out2.reshape(N, Nr, dim_k).transpose(1, 0, 2)


def relation_unit_forward(f_a, position_embedding, params, *, dim_k, dim_g,
                          use_bf16=False):
    """Single RelationUnit head; params use the PyTorch shapes of the module."""
    stacked = {k: jnp.asarray(v)[None] for k, v in params.items()}
    out = relation_unit_forward_batched(f_a, position_embedding, stacked,
                                        dim_k=dim_k, dim_g=dim_g,
                                        use_bf16=use_bf16, head_groups=1)
    return out[0]


def _reference_forward(f_a, position_embedding, params_h, *, dim_k, dim_g):
    """Pure-JAX reference matching the PyTorch module for one head."""
    N = f_a.shape[0]
    pos = position_embedding.reshape(-1, dim_g)
    w_g = jnp.maximum(pos @ params_h["WG_w"].T + params_h["WG_b"], 0.0)   # (N*N, 1)
    w_k = f_a @ params_h["WK_w"].T + params_h["WK_b"]                     # (N, dim_k)
    w_q = f_a @ params_h["WQ_w"].T + params_h["WQ_b"]
    scaled = (w_k @ w_q.T) / np.sqrt(dim_k)
    logits = jnp.log(jnp.clip(w_g.reshape(N, N), 1e-6, None)) + scaled
    w_mn = jax.nn.softmax(logits, axis=1)
    w_v = f_a @ params_h["WV_w"].T + params_h["WV_b"]
    return w_mn @ w_v


def _init_params(key, Nr, D_a, dim_k, dim_g):
    ks = jax.random.split(key, 8)
    return {
        "WG_w": jax.random.normal(ks[0], (Nr, 1, dim_g), jnp.float32) * 0.1,
        "WG_b": jax.random.normal(ks[1], (Nr, 1), jnp.float32) * 0.1,
        "WK_w": jax.random.normal(ks[2], (Nr, dim_k, D_a), jnp.float32) * 0.05,
        "WK_b": jax.random.normal(ks[3], (Nr, dim_k), jnp.float32) * 0.05,
        "WQ_w": jax.random.normal(ks[4], (Nr, dim_k, D_a), jnp.float32) * 0.05,
        "WQ_b": jax.random.normal(ks[5], (Nr, dim_k), jnp.float32) * 0.05,
        "WV_w": jax.random.normal(ks[6], (Nr, dim_k, D_a), jnp.float32) * 0.05,
        "WV_b": jax.random.normal(ks[7], (Nr, dim_k), jnp.float32) * 0.05,
    }


if __name__ == "__main__":
    # Small shapes consistent with the module's forward pass.
    N = 8          # number of objects
    D_a = 128      # appearance_feature_dim
    dim_k = 64     # key_feature_dim
    dim_g = 64     # geo_feature_dim
    Nr = 4         # relation heads batched into one pallas_call

    key = jax.random.PRNGKey(0)
    k_fa, k_pos, k_par = jax.random.split(key, 3)
    f_a = jax.random.normal(k_fa, (N, D_a), dtype=jnp.float32)
    position_embedding = jax.random.uniform(k_pos, (N * N, dim_g), dtype=jnp.float32)
    params = _init_params(k_par, Nr, D_a, dim_k, dim_g)

    fwd_f32 = jax.jit(functools.partial(relation_unit_forward_batched,
                                        dim_k=dim_k, dim_g=dim_g, use_bf16=False))
    fwd_bf16 = jax.jit(functools.partial(relation_unit_forward_batched,
                                         dim_k=dim_k, dim_g=dim_g, use_bf16=True))
    fwd_2steps = jax.jit(functools.partial(relation_unit_forward_batched,
                                           dim_k=dim_k, dim_g=dim_g,
                                           use_bf16=False, head_groups=2))

    out_f32 = jax.block_until_ready(fwd_f32(f_a, position_embedding, params))
    out_bf16 = jax.block_until_ready(fwd_bf16(f_a, position_embedding, params))
    out_2st = jax.block_until_ready(fwd_2steps(f_a, position_embedding, params))
    assert out_f32.shape == (Nr, N, dim_k), out_f32.shape

    for h in range(Nr):
        params_h = {k: v[h] for k, v in params.items()}
        ref = _reference_forward(f_a, position_embedding, params_h,
                                 dim_k=dim_k, dim_g=dim_g)
        np.testing.assert_allclose(np.asarray(out_f32[h]), np.asarray(ref),
                                   rtol=2e-3, atol=2e-3)
        np.testing.assert_allclose(np.asarray(out_2st[h]), np.asarray(ref),
                                   rtol=2e-3, atol=2e-3)
        np.testing.assert_allclose(np.asarray(out_bf16[h]), np.asarray(ref),
                                   rtol=3e-2, atol=3e-2)

    # Single-head convenience path (original module signature).
    params_0 = {k: v[0] for k, v in params.items()}
    out_single = jax.block_until_ready(
        relation_unit_forward(f_a, position_embedding, params_0,
                              dim_k=dim_k, dim_g=dim_g, use_bf16=False))
    ref_0 = _reference_forward(f_a, position_embedding, params_0,
                               dim_k=dim_k, dim_g=dim_g)
    np.testing.assert_allclose(np.asarray(out_single), np.asarray(ref_0),
                               rtol=2e-3, atol=2e-3)

    print("KERNEL_OK")
</pallas_src>

<mosaic_0001>
module attributes {stable_mosaic.version = 11 : i64} {
  func.func @_relation_kernel(%arg0: i32, %arg1: memref<8x128xf32, #tpu.memory_space<vmem>>, %arg2: memref<4x8x8xf32, #tpu.memory_space<vmem>>, %arg3: memref<128x768xf32, #tpu.memory_space<vmem>>, %arg4: memref<1x1x768xf32, #tpu.memory_space<vmem>>, %arg5: memref<8x256xf32, #tpu.memory_space<vmem>>) attributes {dimension_semantics = [#tpu.dimension_semantics<parallel>], iteration_bounds = array<i64: 1>, scalar_prefetch = 0 : i64, scratch_operands = 0 : i64, tpu.core_type = #tpu.core_type<tc>, window_params = [{pipeline_mode = #tpu.pipeline_mode<synchronous>, transform_indices = @transform_0, window_bounds = array<i64: 8, 128>}, {transform_indices = @transform_1, window_bounds = array<i64: 4, 8, 8>}, {transform_indices = @transform_2, window_bounds = array<i64: 128, 768>}, {transform_indices = @transform_3, window_bounds = array<i64: 1, 1, 768>}, {transform_indices = @transform_4, window_bounds = array<i64: 8, 256>}]} {
    %c0 = arith.constant 0 : index
    %c0_0 = arith.constant 0 : index
    %0 = vector.load %arg1[%c0, %c0_0] : memref<8x128xf32, #tpu.memory_space<vmem>>, vector<8x128xf32>
    %c0_1 = arith.constant 0 : index
    %c0_2 = arith.constant 0 : index
    %1 = vector.load %arg3[%c0_1, %c0_2] : memref<128x768xf32, #tpu.memory_space<vmem>>, vector<128x768xf32>
    %cst = arith.constant dense<0.000000e+00> : vector<8x768xf32>
    %2 = tpu.matmul %0, %1, %cst {dimension_numbers = #tpu.dot_dimension_numbers<[1], [0], [0], [1], [0, 0, 1, 1], [], []>} : vector<8x128xf32>, vector<128x768xf32>, vector<8x768xf32> -> vector<8x768xf32>
    %c0_3 = arith.constant 0 : index
    %c0_4 = arith.constant 0 : index
    %c0_5 = arith.constant 0 : index
    %3 = vector.load %arg4[%c0_3, %c0_4, %c0_5] : memref<1x1x768xf32, #tpu.memory_space<vmem>>, vector<1x1x768xf32>
    %4 = vector.shape_cast %3 : vector<1x1x768xf32> to vector<1x768xf32>
    %5 = vector.broadcast %4 : vector<1x768xf32> to vector<8x768xf32>
    %6 = arith.addf %2, %5 : vector<8x768xf32>
    %7 = vector.extract_strided_slice %6 {offsets = [0, 0], sizes = [8, 256], strides = [1, 1]} : vector<8x768xf32> to vector<8x256xf32>
    %8 = vector.extract_strided_slice %6 {offsets = [0, 256], sizes = [8, 256], strides = [1, 1]} : vector<8x768xf32> to vector<8x256xf32>
    %9 = vector.extract_strided_slice %6 {offsets = [0, 512], sizes = [8, 256], strides = [1, 1]} : vector<8x768xf32> to vector<8x256xf32>
    %10 = vector.extract_strided_slice %7 {offsets = [0, 0], sizes = [8, 64], strides = [1, 1]} : vector<8x256xf32> to vector<8x64xf32>
    %11 = vector.extract_strided_slice %8 {offsets = [0, 0], sizes = [8, 64], strides = [1, 1]} : vector<8x256xf32> to vector<8x64xf32>
    %12 = vector.extract_strided_slice %9 {offsets = [0, 0], sizes = [8, 64], strides = [1, 1]} : vector<8x256xf32> to vector<8x64xf32>
    %cst_6 = arith.constant dense<0.000000e+00> : vector<8x8xf32>
    %13 = tpu.matmul %10, %11, %cst_6 {dimension_numbers = #tpu.dot_dimension_numbers<[1], [1], [0], [0], [0, 0, 1, 0], [], []>} : vector<8x64xf32>, vector<8x64xf32>, vector<8x8xf32> -> vector<8x8xf32>
    %c0_7 = arith.constant 0 : index
    %c0_8 = arith.constant 0 : index
    %c0_9 = arith.constant 0 : index
    %14 = vector.load %arg2[%c0_7, %c0_8, %c0_9] : memref<4x8x8xf32, #tpu.memory_space<vmem>>, vector<1x8x8xf32>
    %15 = vector.shape_cast %14 : vector<1x8x8xf32> to vector<8x8xf32>
    %16 = arith.addf %15, %13 : vector<8x8xf32>
    %cst_10 = arith.constant dense<0xFF800000> : vector<8xf32>
    %17 = vector.multi_reduction <maximumf>, %16, %cst_10 [1] : vector<8x8xf32> to vector<8xf32>
    %18 = vector.shape_cast %17 : vector<8xf32> to vector<8x1xf32>
    %19 = vector.broadcast %18 : vector<8x1xf32> to vector<8x8xf32>
    %20 = arith.subf %16, %19 : vector<8x8xf32>
    %21 = math.exp %20 : vector<8x8xf32>
    %cst_11 = arith.constant dense<0.000000e+00> : vector<8xf32>
    %22 = vector.multi_reduction <add>, %21, %cst_11 [1] : vector<8x8xf32> to vector<8xf32>
    %23 = vector.shape_cast %22 : vector<8xf32> to vector<8x1xf32>
    %24 = vector.broadcast %23 : vector<8x1xf32> to vector<8x8xf32>
    %25 = arith.divf %21, %24 : vector<8x8xf32>
    %cst_12 = arith.constant dense<0.000000e+00> : vector<8x64xf32>
    %26 = tpu.matmul %25, %12, %cst_12 {dimension_numbers = #tpu.dot_dimension_numbers<[1], [0], [0], [1], [0, 0, 1, 1], [], []>} : vector<8x8xf32>, vector<8x64xf32>, vector<8x64xf32> -> vector<8x64xf32>
    %27 = vector.extract_strided_slice %7 {offsets = [0, 64], sizes = [8, 64], strides = [1, 1]} : vector<8x256xf32> to vector<8x64xf32>
    %28 = vector.extract_strided_slice %8 {offsets = [0, 64], sizes = [8, 64], strides = [1, 1]} : vector<8x256xf32> to vector<8x64xf32>
    %29 = vector.extract_strided_slice %9 {offsets = [0, 64], sizes = [8, 64], strides = [1, 1]} : vector<8x256xf32> to vector<8x64xf32>
    %cst_13 = arith.constant dense<0.000000e+00> : vector<8x8xf32>
    %30 = tpu.matmul %27, %28, %cst_13 {dimension_numbers = #tpu.dot_dimension_numbers<[1], [1], [0], [0], [0, 0, 1, 0], [], []>} : vector<8x64xf32>, vector<8x64xf32>, vector<8x8xf32> -> vector<8x8xf32>
    %c1 = arith.constant 1 : index
    %c0_14 = arith.constant 0 : index
    %c0_15 = arith.constant 0 : index
    %31 = vector.load %arg2[%c1, %c0_14, %c0_15] : memref<4x8x8xf32, #tpu.memory_space<vmem>>, vector<1x8x8xf32>
    %32 = vector.shape_cast %31 : vector<1x8x8xf32> to vector<8x8xf32>
    %33 = arith.addf %32, %30 : vector<8x8xf32>
    %cst_16 = arith.constant dense<0xFF800000> : vector<8xf32>
    %34 = vector.multi_reduction <maximumf>, %33, %cst_16 [1] : vector<8x8xf32> to vector<8xf32>
    %35 = vector.shape_cast %34 : vector<8xf32> to vector<8x1xf32>
    %36 = vector.broadcast %35 : vector<8x1xf32> to vector<8x8xf32>
    %37 = arith.subf %33, %36 : vector<8x8xf32>
    %38 = math.exp %37 : vector<8x8xf32>
    %cst_17 = arith.constant dense<0.000000e+00> : vector<8xf32>
    %39 = vector.multi_reduction <add>, %38, %cst_17 [1] : vector<8x8xf32> to vector<8xf32>
    %40 = vector.shape_cast %39 : vector<8xf32> to vector<8x1xf32>
    %41 = vector.broadcast %40 : vector<8x1xf32> to vector<8x8xf32>
    %42 = arith.divf %38, %41 : vector<8x8xf32>
    %cst_18 = arith.constant dense<0.000000e+00> : vector<8x64xf32>
    %43 = tpu.matmul %42, %29, %cst_18 {dimension_numbers = #tpu.dot_dimension_numbers<[1], [0], [0], [1], [0, 0, 1, 1], [], []>} : vector<8x8xf32>, vector<8x64xf32>, vector<8x64xf32> -> vector<8x64xf32>
    %44 = vector.extract_strided_slice %7 {offsets = [0, 128], sizes = [8, 64], strides = [1, 1]} : vector<8x256xf32> to vector<8x64xf32>
    %45 = vector.extract_strided_slice %8 {offsets = [0, 128], sizes = [8, 64], strides = [1, 1]} : vector<8x256xf32> to vector<8x64xf32>
    %46 = vector.extract_strided_slice %9 {offsets = [0, 128], sizes = [8, 64], strides = [1, 1]} : vector<8x256xf32> to vector<8x64xf32>
    %cst_19 = arith.constant dense<0.000000e+00> : vector<8x8xf32>
    %47 = tpu.matmul %44, %45, %cst_19 {dimension_numbers = #tpu.dot_dimension_numbers<[1], [1], [0], [0], [0, 0, 1, 0], [], []>} : vector<8x64xf32>, vector<8x64xf32>, vector<8x8xf32> -> vector<8x8xf32>
    %c2 = arith.constant 2 : index
    %c0_20 = arith.constant 0 : index
    %c0_21 = arith.constant 0 : index
    %48 = vector.load %arg2[%c2, %c0_20, %c0_21] : memref<4x8x8xf32, #tpu.memory_space<vmem>>, vector<1x8x8xf32>
    %49 = vector.shape_cast %48 : vector<1x8x8xf32> to vector<8x8xf32>
    %50 = arith.addf %49, %47 : vector<8x8xf32>
    %cst_22 = arith.constant dense<0xFF800000> : vector<8xf32>
    %51 = vector.multi_reduction <maximumf>, %50, %cst_22 [1] : vector<8x8xf32> to vector<8xf32>
    %52 = vector.shape_cast %51 : vector<8xf32> to vector<8x1xf32>
    %53 = vector.broadcast %52 : vector<8x1xf32> to vector<8x8xf32>
    %54 = arith.subf %50, %53 : vector<8x8xf32>
    %55 = math.exp %54 : vector<8x8xf32>
    %cst_23 = arith.constant dense<0.000000e+00> : vector<8xf32>
    %56 = vector.multi_reduction <add>, %55, %cst_23 [1] : vector<8x8xf32> to vector<8xf32>
    %57 = vector.shape_cast %56 : vector<8xf32> to vector<8x1xf32>
    %58 = vector.broadcast %57 : vector<8x1xf32> to vector<8x8xf32>
    %59 = arith.divf %55, %58 : vector<8x8xf32>
    %cst_24 = arith.constant dense<0.000000e+00> : vector<8x64xf32>
    %60 = tpu.matmul %59, %46, %cst_24 {dimension_numbers = #tpu.dot_dimension_numbers<[1], [0], [0], [1], [0, 0, 1, 1], [], []>} : vector<8x8xf32>, vector<8x64xf32>, vector<8x64xf32> -> vector<8x64xf32>
    %61 = vector.extract_strided_slice %7 {offsets = [0, 192], sizes = [8, 64], strides = [1, 1]} : vector<8x256xf32> to vector<8x64xf32>
    %62 = vector.extract_strided_slice %8 {offsets = [0, 192], sizes = [8, 64], strides = [1, 1]} : vector<8x256xf32> to vector<8x64xf32>
    %63 = vector.extract_strided_slice %9 {offsets = [0, 192], sizes = [8, 64], strides = [1, 1]} : vector<8x256xf32> to vector<8x64xf32>
    %cst_25 = arith.constant dense<0.000000e+00> : vector<8x8xf32>
    %64 = tpu.matmul %61, %62, %cst_25 {dimension_numbers = #tpu.dot_dimension_numbers<[1], [1], [0], [0], [0, 0, 1, 0], [], []>} : vector<8x64xf32>, vector<8x64xf32>, vector<8x8xf32> -> vector<8x8xf32>
    %c3 = arith.constant 3 : index
    %c0_26 = arith.constant 0 : index
    %c0_27 = arith.constant 0 : index
    %65 = vector.load %arg2[%c3, %c0_26, %c0_27] : memref<4x8x8xf32, #tpu.memory_space<vmem>>, vector<1x8x8xf32>
    %66 = vector.shape_cast %65 : vector<1x8x8xf32> to vector<8x8xf32>
    %67 = arith.addf %66, %64 : vector<8x8xf32>
    %cst_28 = arith.constant dense<0xFF800000> : vector<8xf32>
    %68 = vector.multi_reduction <maximumf>, %67, %cst_28 [1] : vector<8x8xf32> to vector<8xf32>
    %69 = vector.shape_cast %68 : vector<8xf32> to vector<8x1xf32>
    %70 = vector.broadcast %69 : vector<8x1xf32> to vector<8x8xf32>
    %71 = arith.subf %67, %70 : vector<8x8xf32>
    %72 = math.exp %71 : vector<8x8xf32>
    %cst_29 = arith.constant dense<0.000000e+00> : vector<8xf32>
    %73 = vector.multi_reduction <add>, %72, %cst_29 [1] : vector<8x8xf32> to vector<8xf32>
    %74 = vector.shape_cast %73 : vector<8xf32> to vector<8x1xf32>
    %75 = vector.broadcast %74 : vector<8x1xf32> to vector<8x8xf32>
    %76 = arith.divf %72, %75 : vector<8x8xf32>
    %cst_30 = arith.constant dense<0.000000e+00> : vector<8x64xf32>
    %77 = tpu.matmul %76, %63, %cst_30 {dimension_numbers = #tpu.dot_dimension_numbers<[1], [0], [0], [1], [0, 0, 1, 1], [], []>} : vector<8x8xf32>, vector<8x64xf32>, vector<8x64xf32> -> vector<8x64xf32>
    %78 = tpu.concatenate %26, %43, %60, %77 in 1 : vector<8x64xf32>, vector<8x64xf32>, vector<8x64xf32>, vector<8x64xf32> -> vector<8x256xf32>
    %c0_31 = arith.constant 0 : index
    %c0_32 = arith.constant 0 : index
    %79 = vector.load %arg5[%c0_31, %c0_32] : memref<8x256xf32, #tpu.memory_space<vmem>>, vector<8x256xf32>
    tpu.vector_store %arg5[%c0_31, %c0_32], %78 {strides = array<i32>} : memref<8x256xf32, #tpu.memory_space<vmem>>, vector<8x256xf32>,
    return
  }
  func.func @transform_0(%arg0: i32) -> (i32, i32) {
    %c0_i32 = arith.constant 0 : i32
    %c0_i32_0 = arith.constant 0 : i32
    %c0_i32_1 = arith.constant 0 : i32
    return %c0_i32, %c0_i32_0 : i32, i32
  }
  func.func @transform_1(%arg0: i32) -> (i32, i32, i32) {
    %c0_i32 = arith.constant 0 : i32
    %c0_i32_0 = arith.constant 0 : i32
    %c0_i32_1 = arith.constant 0 : i32
    return %arg0, %c0_i32, %c0_i32_0 : i32, i32, i32
  }
  func.func @transform_2(%arg0: i32) -> (i32, i32) {
    %c0_i32 = arith.constant 0 : i32
    %c0_i32_0 = arith.constant 0 : i32
    return %c0_i32, %arg0 : i32, i32
  }
  func.func @transform_3(%arg0: i32) -> (i32, i32, i32) {
    %c0_i32 = arith.constant 0 : i32
    %c0_i32_0 = arith.constant 0 : i32
    %c0_i32_1 = arith.constant 0 : i32
    return %arg0, %c0_i32, %c0_i32_0 : i32, i32, i32
  }
  func.func @transform_4(%arg0: i32) -> (i32, i32) {
    %c0_i32 = arith.constant 0 : i32
    %c0_i32_0 = arith.constant 0 : i32
    return %c0_i32, %arg0 : i32, i32
  }
}

</mosaic_0001>

<llo_original>
// kernel: relation_unit_forward_batched.1
$region0: #{relation_unit_forward_batched.1}
  #allocation0 [shape = 'u32[]', space=smem, size = 0x4, offset = 0x4, fixed_abs, tag = 'smem constant byte address 0x4 - core index']
  #allocation1 [shape = 'u32[144,128]{1,0:T(1,128)}', space=vmem, size = 0x12000, scoped, tag = 'internal scratch']
  %s0 = inlined_call_operand.vmem [shape: f32[8,128], index: 0, kind: input, shape index: {}]
  %s1 = inlined_call_operand.vmem [shape: f32[4,8,8], index: 1, kind: input, shape index: {}]
  %s2 = inlined_call_operand.vmem [shape: f32[128,768], index: 2, kind: input, shape index: {}]
  %s3 = inlined_call_operand.vmem [shape: f32[1,1,768], index: 3, kind: input, shape index: {}]
  %s4 = inlined_call_operand.vmem [shape: f32[8,256], index: 4, kind: output, shape index: {}]
  %s5 = sld [smem:[#allocation0]]
  $region26: #{relation_unit_forward_batched.1} parent=0
    _
  %s7 = ssub.s32 1, %s5
  %s8 = scalar_select 0, %s7, %s5
  // Predicated region
  $region2: #{relation_unit_forward_batched.1} parent=0 // pred_check
    _
  $region3: #{relation_unit_forward_batched.1} parent=0 // pred_check_branch
    %10 = sbr.rel (0) target = $region5
  $region4: #{relation_unit_forward_batched.1} parent=0 // pred_region
    _
  $region5: #{relation_unit_forward_batched.1} parent=0 // pred_fallthru
    _
  // Predicated region
  $region6: #{relation_unit_forward_batched.1} parent=0 // pred_check
    _
  $region7: #{relation_unit_forward_batched.1} parent=0 // pred_check_branch
    %12 = sbr.rel (0) target = $region9
  $region8: #{relation_unit_forward_batched.1} parent=0 // pred_region
    _
  $region9: #{relation_unit_forward_batched.1} parent=0 // pred_fallthru
    _
  // Predicated region
  $region10: #{relation_unit_forward_batched.1} parent=0 // pred_check
    _
  $region11: #{relation_unit_forward_batched.1} parent=0 // pred_check_branch
    %14 = sbr.rel (0) target = $region13
  $region12: #{relation_unit_forward_batched.1} parent=0 // pred_region
    _
  $region13: #{relation_unit_forward_batched.1} parent=0 // pred_fallthru
    _
  // Predicated region
  $region14: #{relation_unit_forward_batched.1} parent=0 // pred_check
    _
  $region15: #{relation_unit_forward_batched.1} parent=0 // pred_check_branch
    %16 = sbr.rel (0) target = $region17
  $region16: #{relation_unit_forward_batched.1} parent=0 // pred_region
    _
  $region17: #{relation_unit_forward_batched.1} parent=0 // pred_fallthru
    _
  %v17 = vld [vmem:[%s0] sm:$0xff]
  %v18 = vld [vmem:[%s2] sm:$0xff]
  %v19 = vld [vmem:[%s2 + $0x8] sm:$0xff]
  %v20 = vld [vmem:[%s2 + $0x10] sm:$0xff]
  %v21 = vld [vmem:[%s2 + $0x18] sm:$0xff]
  %v22 = vld [vmem:[%s2 + $0x20] sm:$0xff]
  %v23 = vld [vmem:[%s2 + $0x28] sm:$0xff]
  %v24 = vld [vmem:[%s2 + $0x30] sm:$0xff]
  %v25 = vld [vmem:[%s2 + $0x38] sm:$0xff]
  %v26 = vld [vmem:[%s2 + $0x40] sm:$0xff]
  %v27 = vld [vmem:[%s2 + $0x48] sm:$0xff]
  %v28 = vld [vmem:[%s2 + $0x50] sm:$0xff]
  %v29 = vld [vmem:[%s2 + $0x58] sm:$0xff]
  %v30 = vld [vmem:[%s2 + $0x60] sm:$0xff]
  %v31 = vld [vmem:[%s2 + $0x68] sm:$0xff]
  %v32 = vld [vmem:[%s2 + $0x70] sm:$0xff]
  %v33 = vld [vmem:[%s2 + $0x78] sm:$0xff]
  %v34 = vld [vmem:[%s2 + $0x80] sm:$0xff]
  %v35 = vld [vmem:[%s2 + $0x88] sm:$0xff]
  %v36 = vld [vmem:[%s2 + $0x90] sm:$0xff]
  %v37 = vld [vmem:[%s2 + $0x98] sm:$0xff]
  %v38 = vld [vmem:[%s2 + $0xa0] sm:$0xff]
  %v39 = vld [vmem:[%s2 + $0xa8] sm:$0xff]
  %v40 = vld [vmem:[%s2 + $0xb0] sm:$0xff]
  %v41 = vld [vmem:[%s2 + $0xb8] sm:$0xff]
  %v42 = vld [vmem:[%s2 + $0xc0] sm:$0xff]
  %v43 = vld [vmem:[%s2 + $0xc8] sm:$0xff]
  %v44 = vld [vmem:[%s2 + $0xd0] sm:$0xff]
  %v45 = vld [vmem:[%s2 + $0xd8] sm:$0xff]
  %v46 = vld [vmem:[%s2 + $0xe0] sm:$0xff]
  %v47 = vld [vmem:[%s2 + $0xe8] sm:$0xff]
  %v48 = vld [vmem:[%s2 + $0xf0] sm:$0xff]
  %v49 = vld [vmem:[%s2 + $0xf8] sm:$0xff]
  %v50 = vld [vmem:[%s2 + $0x100] sm:$0xff]
  %v51 = vld [vmem:[%s2 + $0x108] sm:$0xff]
  %v52 = vld [vmem:[%s2 + $0x110] sm:$0xff]
  %v53 = vld [vmem:[%s2 + $0x118] sm:$0xff]
  %v54 = vld [vmem:[%s2 + $0x120] sm:$0xff]
  %v55 = vld [vmem:[%s2 + $0x128] sm:$0xff]
  %v56 = vld [vmem:[%s2 + $0x130] sm:$0xff]
  %v57 = vld [vmem:[%s2 + $0x138] sm:$0xff]
  %v58 = vld [vmem:[%s2 + $0x140] sm:$0xff]
  %v59 = vld [vmem:[%s2 + $0x148] sm:$0xff]
  %v60 = vld [vmem:[%s2 + $0x150] sm:$0xff]
  %v61 = vld [vmem:[%s2 + $0x158] sm:$0xff]
  %v62 = vld [vmem:[%s2 + $0x160] sm:$0xff]
  %v63 = vld [vmem:[%s2 + $0x168] sm:$0xff]
  %v64 = vld [vmem:[%s2 + $0x170] sm:$0xff]
  %v65 = vld [vmem:[%s2 + $0x178] sm:$0xff]
  %v66 = vld [vmem:[%s2 + $0x180] sm:$0xff]
  %v67 = vld [vmem:[%s2 + $0x188] sm:$0xff]
  %v68 = vld [vmem:[%s2 + $0x190] sm:$0xff]
  %v69 = vld [vmem:[%s2 + $0x198] sm:$0xff]
  %v70 = vld [vmem:[%s2 + $0x1a0] sm:$0xff]
  %v71 = vld [vmem:[%s2 + $0x1a8] sm:$0xff]
  %v72 = vld [vmem:[%s2 + $0x1b0] sm:$0xff]
  %v73 = vld [vmem:[%s2 + $0x1b8] sm:$0xff]
  %v74 = vld [vmem:[%s2 + $0x1c0] sm:$0xff]
  %v75 = vld [vmem:[%s2 + $0x1c8] sm:$0xff]
  %v76 = vld [vmem:[%s2 + $0x1d0] sm:$0xff]
  %v77 = vld [vmem:[%s2 + $0x1d8] sm:$0xff]
  %v78 = vld [vmem:[%s2 + $0x1e0] sm:$0xff]
  %v79 = vld [vmem:[%s2 + $0x1e8] sm:$0xff]
  %v80 = vld [vmem:[%s2 + $0x1f0] sm:$0xff]
  %v81 = vld [vmem:[%s2 + $0x1f8] sm:$0xff]
  %v82 = vld [vmem:[%s2 + $0x200] sm:$0xff]
  %v83 = vld [vmem:[%s2 + $0x208] sm:$0xff]
  %v84 = vld [vmem:[%s2 + $0x210] sm:$0xff]
  %v85 = vld [vmem:[%s2 + $0x218] sm:$0xff]
  %v86 = vld [vmem:[%s2 + $0x220] sm:$0xff]
  %v87 = vld [vmem:[%s2 + $0x228] sm:$0xff]
  %v88 = vld [vmem:[%s2 + $0x230] sm:$0xff]
  %v89 = vld [vmem:[%s2 + $0x238] sm:$0xff]
  %v90 = vld [vmem:[%s2 + $0x240] sm:$0xff]
  %v91 = vld [vmem:[%s2 + $0x248] sm:$0xff]
  %v92 = vld [vmem:[%s2 + $0x250] sm:$0xff]
  %v93 = vld [vmem:[%s2 + $0x258] sm:$0xff]
  %v94 = vld [vmem:[%s2 + $0x260] sm:$0xff]
  %v95 = vld [vmem:[%s2 + $0x268] sm:$0xff]
  %v96 = vld [vmem:[%s2 + $0x270] sm:$0xff]
  %v97 = vld [vmem:[%s2 + $0x278] sm:$0xff]
  %v98 = vld [vmem:[%s2 + $0x280] sm:$0xff]
  %v99 = vld [vmem:[%s2 + $0x288] sm:$0xff]
  %v100 = vld [vmem:[%s2 + $0x290] sm:$0xff]
  %v101 = vld [vmem:[%s2 + $0x298] sm:$0xff]
  %v102 = vld [vmem:[%s2 + $0x2a0] sm:$0xff]
  %v103 = vld [vmem:[%s2 + $0x2a8] sm:$0xff]
  %v104 = vld [vmem:[%s2 + $0x2b0] sm:$0xff]
  %v105 = vld [vmem:[%s2 + $0x2b8] sm:$0xff]
  %v106 = vld [vmem:[%s2 + $0x2c0] sm:$0xff]
  %v107 = vld [vmem:[%s2 + $0x2c8] sm:$0xff]
  %v108 = vld [vmem:[%s2 + $0x2d0] sm:$0xff]
  %v109 = vld [vmem:[%s2 + $0x2d8] sm:$0xff]
  %v110 = vld [vmem:[%s2 + $0x2e0] sm:$0xff]
  %v111 = vld [vmem:[%s2 + $0x2e8] sm:$0xff]
  %v112 = vld [vmem:[%s2 + $0x2f0] sm:$0xff]
  %v113 = vld [vmem:[%s2 + $0x2f8] sm:$0xff]
  %v114 = vld [vmem:[%s3] sm:$0x3f]
  %v116 = vlaneseq
  %v117 = vshrl.u32 %v116, 7
  %v118 = vsub.s32 0, %v117
  %v119 = vrot.slane %v114, %v118
  %v120 = vlaneseq
  %v121 = vshrl.u32 %v120, 7
  %v122 = vsub.s32 1, %v121
  %v123 = vrot.slane %v114, %v122
  %v124 = vlaneseq
  %v125 = vshrl.u32 %v124, 7
  %v126 = vsub.s32 2, %v125
  %v127 = vrot.slane %v114, %v126
  %v128 = vlaneseq
  %v129 = vshrl.u32 %v128, 7
  %v130 = vsub.s32 3, %v129
  %v131 = vrot.slane %v114, %v130
  %v132 = vlaneseq
  %v133 = vshrl.u32 %v132, 7
  %v134 = vsub.s32 4, %v133
  %v135 = vrot.slane %v114, %v134
  %v136 = vlaneseq
  %v137 = vshrl.u32 %v136, 7
  %v138 = vsub.s32 5, %v137
  %v139 = vrot.slane %v114, %v138
  %146 = vmatprep.subr.mxu0 %v19
  %147 = vmatpush1.msra.mxu0 %v18
  %148 = vmatprep.subr.mxu0 %v25
  %149 = vmatpush1.msra.mxu0 %v24
  %150 = vmatprep.subr.mxu0 %v31
  %151 = vmatpush1.msra.mxu0 %v30
  %152 = vmatprep.subr.mxu0 %v37
  %153 = vmatpush1.msra.mxu0 %v36
  %154 = vmatprep.subr.mxu0 %v43
  %155 = vmatpush1.msra.mxu0 %v42
  %156 = vmatprep.subr.mxu0 %v49
  %157 = vmatpush1.msra.mxu0 %v48
  %158 = vmatprep.subr.mxu0 %v55
  %159 = vmatpush1.msra.mxu0 %v54
  %160 = vmatprep.subr.mxu0 %v61
  %161 = vmatpush1.msra.mxu0 %v60
  %162 = vmatprep.subr.mxu0 %v67
  %163 = vmatpush1.msra.mxu0 %v66
  %164 = vmatprep.subr.mxu0 %v73
  %165 = vmatpush1.msra.mxu0 %v72
  %166 = vmatprep.subr.mxu0 %v79
  %167 = vmatpush1.msra.mxu0 %v78
  %168 = vmatprep.subr.mxu0 %v85
  %169 = vmatpush1.msra.mxu0 %v84
  %170 = vmatprep.subr.mxu0 %v91
  %171 = vmatpush1.msra.mxu0 %v90
  %172 = vmatprep.subr.mxu0 %v97
  %173 = vmatpush1.msra.mxu0 %v96
  %174 = vmatprep.subr.mxu0 %v103
  %175 = vmatpush1.msra.mxu0 %v102
  %176 = vmatprep.subr.mxu0 %v109
  %177 = vmatpush1.msra.mxu0 %v108
  %178 = vmatprep.subr.mxu0 0.0
  %179 = vmatpush1.msra.mxu0 0.0
  %180 = vmatprep.subr.mxu0 0.0
  %181 = vmatpush1.msra.mxu0 0.0
  %182 = vmatprep.subr.mxu0 0.0
  %183 = vmatpush1.msra.mxu0 0.0
  %184 = vmatprep.subr.mxu0 0.0
  %185 = vmatpush1.msra.mxu0 0.0
  %186 = vmatprep.subr.mxu0 0.0
  %187 = vmatpush1.msra.mxu0 0.0
  %188 = vmatprep.subr.mxu0 0.0
  %189 = vmatpush1.msra.mxu0 0.0
  %190 = vmatprep.subr.mxu0 0.0
  %191 = vmatpush1.msra.mxu0 0.0
  %192 = vmatprep.subr.mxu0 0.0
  %193 = vmatpush1.msra.mxu0 0.0
  %194 = vmatprep.subr.mxu0 0.0
  %195 = vmatpush1.msra.mxu0 0.0
  %196 = vmatprep.subr.mxu0 0.0
  %197 = vmatpush1.msra.mxu0 0.0
  %198 = vmatprep.subr.mxu0 0.0
  %199 = vmatpush1.msra.mxu0 0.0
  %200 = vmatprep.subr.mxu0 0.0
  %201 = vmatpush1.msra.mxu0 0.0
  %202 = vmatprep.subr.mxu0 0.0
  %203 = vmatpush1.msra.mxu0 0.0
  %204 = vmatprep.subr.mxu0 0.0
  %205 = vmatpush1.msra.mxu0 0.0
  %206 = vmatprep.subr.mxu0 0.0
  %207 = vmatpush1.msra.mxu0 0.0
  %208 = vmatprep.subr.mxu0 0.0
  %209 = vmatpush1.msra.mxu0 0.0
  %210 = vmatprep.mubr.f32.mxu0 0.0
  %211 = vmatmul.mubr.f32.gmra.mrb[0].mxu0 %v17
  %v212 = vpop.f32.mrb[0].mxu0
  %v213 = vadd.f32 %v119, %v212
  %v214 = vpop.f32.mrb[0].mxu0
  %v215 = vadd.f32 %v123, %v214
  %216 = vdwg.mxu0
  %217 = vmatprep.subr.mxu0 %v21
  %218 = vmatpush1.msra.mxu0 %v20
  %219 = vmatprep.subr.mxu0 %v27
  %220 = vmatpush1.msra.mxu0 %v26
  %221 = vmatprep.subr.mxu0 %v33
  %222 = vmatpush1.msra.mxu0 %v32
  %223 = vmatprep.subr.mxu0 %v39
  %224 = vmatpush1.msra.mxu0 %v38
  %225 = vmatprep.subr.mxu0 %v45
  %226 = vmatpush1.msra.mxu0 %v44
  %227 = vmatprep.subr.mxu0 %v51
  %228 = vmatpush1.msra.mxu0 %v50
  %229 = vmatprep.subr.mxu0 %v57
  %230 = vmatpush1.msra.mxu0 %v56
  %231 = vmatprep.subr.mxu0 %v63
  %232 = vmatpush1.msra.mxu0 %v62
  %233 = vmatprep.subr.mxu0 %v69
  %234 = vmatpush1.msra.mxu0 %v68
  %235 = vmatprep.subr.mxu0 %v75
  %236 = vmatpush1.msra.mxu0 %v74
  %237 = vmatprep.subr.mxu0 %v81
  %238 = vmatpush1.msra.mxu0 %v80
  %239 = vmatprep.subr.mxu0 %v87
  %240 = vmatpush1.msra.mxu0 %v86
  %241 = vmatprep.subr.mxu0 %v93
  %242 = vmatpush1.msra.mxu0 %v92
  %243 = vmatprep.subr.mxu0 %v99
  %244 = vmatpush1.msra.mxu0 %v98
  %245 = vmatprep.subr.mxu0 %v105
  %246 = vmatpush1.msra.mxu0 %v104
  %247 = vmatprep.subr.mxu0 %v111
  %248 = vmatpush1.msra.mxu0 %v110
  %249 = vmatprep.subr.mxu0 0.0
  %250 = vmatpush1.msra.mxu0 0.0
  %251 = vmatprep.subr.mxu0 0.0
  %252 = vmatpush1.msra.mxu0 0.0
  %253 = vmatprep.subr.mxu0 0.0
  %254 = vmatpush1.msra.mxu0 0.0
  %255 = vmatprep.subr.mxu0 0.0
  %256 = vmatpush1.msra.mxu0 0.0
  %257 = vmatprep.subr.mxu0 0.0
  %258 = vmatpush1.msra.mxu0 0.0
  %259 = vmatprep.subr.mxu0 0.0
  %260 = vmatpush1.msra.mxu0 0.0
  %261 = vmatprep.subr.mxu0 0.0
  %262 = vmatpush1.msra.mxu0 0.0
  %263 = vmatprep.subr.mxu0 0.0
  %264 = vmatpush1.msra.mxu0 0.0
  %265 = vmatprep.subr.mxu0 0.0
  %266 = vmatpush1.msra.mxu0 0.0
  %267 = vmatprep.subr.mxu0 0.0
  %268 = vmatpush1.msra.mxu0 0.0
  %269 = vmatprep.subr.mxu0 0.0
  %270 = vmatpush1.msra.mxu0 0.0
  %271 = vmatprep.subr.mxu0 0.0
  %272 = vmatpush1.msra.mxu0 0.0
  %273 = vmatprep.subr.mxu0 0.0
  %274 = vmatpush1.msra.mxu0 0.0
  %275 = vmatprep.subr.mxu0 0.0
  %276 = vmatpush1.msra.mxu0 0.0
  %277 = vmatprep.subr.mxu0 0.0
  %278 = vmatpush1.msra.mxu0 0.0
  %279 = vmatprep.subr.mxu0 0.0
  %280 = vmatpush1.msra.mxu0 0.0
  %281 = vmatprep.mubr.f32.mxu0 0.0
  %282 = vmatmul.mubr.f32.gmra.mrb[0].mxu0 %v17
  %v283 = vpop.f32.mrb[0].mxu0
  %v284 = vadd.f32 %v127, %v283
  %v285 = vpop.f32.mrb[0].mxu0
  %v286 = vadd.f32 %v131, %v285
  %287 = vdwg.mxu0
  %288 = vmatprep.subr.mxu0 %v23
  %289 = vmatpush1.msra.mxu0 %v22
  %290 = vmatprep.subr.mxu0 %v29
  %291 = vmatpush1.msra.mxu0 %v28
  %292 = vmatprep.subr.mxu0 %v35
  %293 = vmatpush1.msra.mxu0 %v34
  %294 = vmatprep.subr.mxu0 %v41
  %295 = vmatpush1.msra.mxu0 %v40
  %296 = vmatprep.subr.mxu0 %v47
  %297 = vmatpush1.msra.mxu0 %v46
  %298 = vmatprep.subr.mxu0 %v53
  %299 = vmatpush1.msra.mxu0 %v52
  %300 = vmatprep.subr.mxu0 %v59
  %301 = vmatpush1.msra.mxu0 %v58
  %302 = vmatprep.subr.mxu0 %v65
  %303 = vmatpush1.msra.mxu0 %v64
  %304 = vmatprep.subr.mxu0 %v71
  %305 = vmatpush1.msra.mxu0 %v70
  %306 = vmatprep.subr.mxu0 %v77
  %307 = vmatpush1.msra.mxu0 %v76
  %308 = vmatprep.subr.mxu0 %v83
  %309 = vmatpush1.msra.mxu0 %v82
  %310 = vmatprep.subr.mxu0 %v89
  %311 = vmatpush1.msra.mxu0 %v88
  %312 = vmatprep.subr.mxu0 %v95
  %313 = vmatpush1.msra.mxu0 %v94
  %314 = vmatprep.subr.mxu0 %v101
  %315 = vmatpush1.msra.mxu0 %v100
  %316 = vmatprep.subr.mxu0 %v107
  %317 = vmatpush1.msra.mxu0 %v106
  %318 = vmatprep.subr.mxu0 %v113
  %319 = vmatpush1.msra.mxu0 %v112
  %320 = vmatprep.subr.mxu0 0.0
  %321 = vmatpush1.msra.mxu0 0.0
  %322 = vmatprep.subr.mxu0 0.0
  %323 = vmatpush1.msra.mxu0 0.0
  %324 = vmatprep.subr.mxu0 0.0
  %325 = vmatpush1.msra.mxu0 0.0
  %326 = vmatprep.subr.mxu0 0.0
  %327 = vmatpush1.msra.mxu0 0.0
  %328 = vmatprep.subr.mxu0 0.0
  %329 = vmatpush1.msra.mxu0 0.0
  %330 = vmatprep.subr.mxu0 0.0
  %331 = vmatpush1.msra.mxu0 0.0
  %332 = vmatprep.subr.mxu0 0.0
  %333 = vmatpush1.msra.mxu0 0.0
  %334 = vmatprep.subr.mxu0 0.0
  %335 = vmatpush1.msra.mxu0 0.0
  %336 = vmatprep.subr.mxu0 0.0
  %337 = vmatpush1.msra.mxu0 0.0
  %338 = vmatprep.subr.mxu0 0.0
  %339 = vmatpush1.msra.mxu0 0.0
  %340 = vmatprep.subr.mxu0 0.0
  %341 = vmatpush1.msra.mxu0 0.0
  %342 = vmatprep.subr.mxu0 0.0
  %343 = vmatpush1.msra.mxu0 0.0
  %344 = vmatprep.subr.mxu0 0.0
  %345 = vmatpush1.msra.mxu0 0.0
  %346 = vmatprep.subr.mxu0 0.0
  %347 = vmatpush1.msra.mxu0 0.0
  %348 = vmatprep.subr.mxu0 0.0
  %349 = vmatpush1.msra.mxu0 0.0
  %350 = vmatprep.subr.mxu0 0.0
  %351 = vmatpush1.msra.mxu0 0.0
  %352 = vmatprep.mubr.f32.mxu0 0.0
  %353 = vmatmul.mubr.f32.gmra.mrb[0].mxu0 %v17
  %v354 = vpop.f32.mrb[0].mxu0
  %v355 = vadd.f32 %v135, %v354
  %v356 = vpop.f32.mrb[0].mxu0
  %v357 = vadd.f32 %v139, %v356
  %358 = vdwg.mxu0
  %vm359 = vcmask 523264
  %v361 = vsel %vm359, %v213, 0
  %v364 = vsel %vm359, %v284, 0
  %366 = vmatprep.subr.mxu0 0.0
  %367 = vmatpush1.xpose.msra.mxu0 %v364
  %368 = vmatprep.subr.mxu0 0.0
  %369 = vmatpush1.xpose.msra.mxu0 0.0
  %370 = vmatprep.subr.mxu0 0.0
  %371 = vmatpush1.xpose.msra.mxu0 0.0
  %372 = vmatprep.subr.mxu0 0.0
  %373 = vmatpush1.xpose.msra.mxu0 0.0
  %374 = vmatprep.subr.mxu0 0.0
  %375 = vmatpush1.xpose.msra.mxu0 0.0
  %376 = vmatprep.subr.mxu0 0.0
  %377 = vmatpush1.xpose.msra.mxu0 0.0
  %378 = vmatprep.subr.mxu0 0.0
  %379 = vmatpush1.xpose.msra.mxu0 0.0
  %380 = vmatprep.subr.mxu0 0.0
  %381 = vmatpush1.xpose.msra.mxu0 0.0
  %382 = vmatprep.subr.mxu0 0.0
  %383 = vmatpush1.xpose.msra.mxu0 0.0
  %384 = vmatprep.subr.mxu0 0.0
  %385 = vmatpush1.xpose.msra.mxu0 0.0
  %386 = vmatprep.subr.mxu0 0.0
  %387 = vmatpush1.xpose.msra.mxu0 0.0
  %388 = vmatprep.subr.mxu0 0.0
  %389 = vmatpush1.xpose.msra.mxu0 0.0
  %390 = vmatprep.subr.mxu0 0.0
  %391 = vmatpush1.xpose.msra.mxu0 0.0
  %392 = vmatprep.subr.mxu0 0.0
  %393 = vmatpush1.xpose.msra.mxu0 0.0
  %394 = vmatprep.subr.mxu0 0.0
  %395 = vmatpush1.xpose.msra.mxu0 0.0
  %396 = vmatprep.subr.mxu0 0.0
  %397 = vmatpush1.xpose.msra.mxu0 0.0
  %398 = vmatprep.subr.mxu0 0.0
  %399 = vmatpush1.xpose.msra.mxu0 0.0
  %400 = vmatprep.subr.mxu0 0.0
  %401 = vmatpush1.xpose.msra.mxu0 0.0
  %402 = vmatprep.subr.mxu0 0.0
  %403 = vmatpush1.xpose.msra.mxu0 0.0
  %404 = vmatprep.subr.mxu0 0.0
  %405 = vmatpush1.xpose.msra.mxu0 0.0
  %406 = vmatprep.subr.mxu0 0.0
  %407 = vmatpush1.xpose.msra.mxu0 0.0
  %408 = vmatprep.subr.mxu0 0.0
  %409 = vmatpush1.xpose.msra.mxu0 0.0
  %410 = vmatprep.subr.mxu0 0.0
  %411 = vmatpush1.xpose.msra.mxu0 0.0
  %412 = vmatprep.subr.mxu0 0.0
  %413 = vmatpush1.xpose.msra.mxu0 0.0
  %414 = vmatprep.subr.mxu0 0.0
  %415 = vmatpush1.xpose.msra.mxu0 0.0
  %416 = vmatprep.subr.mxu0 0.0
  %417 = vmatpush1.xpose.msra.mxu0 0.0
  %418 = vmatprep.subr.mxu0 0.0
  %419 = vmatpush1.xpose.msra.mxu0 0.0
  %420 = vmatprep.subr.mxu0 0.0
  %421 = vmatpush1.xpose.msra.mxu0 0.0
  %422 = vmatprep.subr.mxu0 0.0
  %423 = vmatpush1.xpose.msra.mxu0 0.0
  %424 = vmatprep.subr.mxu0 0.0
  %425 = vmatpush1.xpose.msra.mxu0 0.0
  %426 = vmatprep.subr.mxu0 0.0
  %427 = vmatpush1.xpose.msra.mxu0 0.0
  %428 = vmatprep.subr.mxu0 0.0
  %429 = vmatpush1.xpose.msra.mxu0 0.0
  %430 = vmatprep.mubr.f32.mxu0 0.0
  %431 = vmatmul.mubr.f32.gmra.mrb[0].mxu0 %v361
  %v432 = vpop.f32.mrb[0].mxu0
  %v433 = vadd.f32 0.0, %v432
  %v434 = vpop.f32.mrb[0].mxu0
  %435 = vdwg.mxu0
  %v436 = vld [vmem:[%s1] sm:$0xff]
  %v437 = vadd.f32 %v436, %v433
  %vm438 = vcmask 64512
  %v439 = vsel %vm438, %v437, -inf
  %440 = vmax.xlane.f32.xlu0 %v439
  %v441 = vpop.xlane.xlu0 %440
  %v442 = vsub.f32 %v437, %v441
  %v443 = vmul.f32 %v442, 1.442695
  %v444 = vpow.pop %v443
  %v445 = vsel %vm438, %v444, 0.0
  %446 = vadd.xlane.f32.xlu0 %v445
  %v447 = vpop.xlane.xlu0 %446
  %v448 = vrcp.pop %v447
  %v449 = vmul.f32 %v444, %v448
  %v451 = vsel %vm438, %v449, 0
  %453 = vmatprep.subr.mxu0 0.0
  %454 = vmatpush1.msra.mxu0 %v355
  %455 = vmatprep.subr.mxu0 0.0
  %456 = vmatpush1.msra.mxu0 0.0
  %457 = vmatprep.subr.mxu0 0.0
  %458 = vmatpush1.msra.mxu0 0.0
  %459 = vmatprep.subr.mxu0 0.0
  %460 = vmatpush1.msra.mxu0 0.0
  %461 = vmatprep.subr.mxu0 0.0
  %462 = vmatpush1.msra.mxu0 0.0
  %463 = vmatprep.subr.mxu0 0.0
  %464 = vmatpush1.msra.mxu0 0.0
  %465 = vmatprep.subr.mxu0 0.0
  %466 = vmatpush1.msra.mxu0 0.0
  %467 = vmatprep.subr.mxu0 0.0
  %468 = vmatpush1.msra.mxu0 0.0
  %469 = vmatprep.subr.mxu0 0.0
  %470 = vmatpush1.msra.mxu0 0.0
  %471 = vmatprep.subr.mxu0 0.0
  %472 = vmatpush1.msra.mxu0 0.0
  %473 = vmatprep.subr.mxu0 0.0
  %474 = vmatpush1.msra.mxu0 0.0
  %475 = vmatprep.subr.mxu0 0.0
  %476 = vmatpush1.msra.mxu0 0.0
  %477 = vmatprep.subr.mxu0 0.0
  %478 = vmatpush1.msra.mxu0 0.0
  %479 = vmatprep.subr.mxu0 0.0
  %480 = vmatpush1.msra.mxu0 0.0
  %481 = vmatprep.subr.mxu0 0.0
  %482 = vmatpush1.msra.mxu0 0.0
  %483 = vmatprep.subr.mxu0 0.0
  %484 = vmatpush1.msra.mxu0 0.0
  %485 = vmatprep.subr.mxu0 0.0
  %486 = vmatpush1.msra.mxu0 0.0
  %487 = vmatprep.subr.mxu0 0.0
  %488 = vmatpush1.msra.mxu0 0.0
  %489 = vmatprep.subr.mxu0 0.0
  %490 = vmatpush1.msra.mxu0 0.0
  %491 = vmatprep.subr.mxu0 0.0
  %492 = vmatpush1.msra.mxu0 0.0
  %493 = vmatprep.subr.mxu0 0.0
  %494 = vmatpush1.msra.mxu0 0.0
  %495 = vmatprep.subr.mxu0 0.0
  %496 = vmatpush1.msra.mxu0 0.0
  %497 = vmatprep.subr.mxu0 0.0
  %498 = vmatpush1.msra.mxu0 0.0
  %499 = vmatprep.subr.mxu0 0.0
  %500 = vmatpush1.msra.mxu0 0.0
  %501 = vmatprep.subr.mxu0 0.0
  %502 = vmatpush1.msra.mxu0 0.0
  %503 = vmatprep.subr.mxu0 0.0
  %504 = vmatpush1.msra.mxu0 0.0
  %505 = vmatprep.subr.mxu0 0.0
  %506 = vmatpush1.msra.mxu0 0.0
  %507 = vmatprep.subr.mxu0 0.0
  %508 = vmatpush1.msra.mxu0 0.0
  %509 = vmatprep.subr.mxu0 0.0
  %510 = vmatpush1.msra.mxu0 0.0
  %511 = vmatprep.subr.mxu0 0.0
  %512 = vmatpush1.msra.mxu0 0.0
  %513 = vmatprep.subr.mxu0 0.0
  %514 = vmatpush1.msra.mxu0 0.0
  %515 = vmatprep.subr.mxu0 0.0
  %516 = vmatpush1.msra.mxu0 0.0
  %517 = vmatprep.mubr.f32.mxu0 0.0
  %518 = vmatmul.mubr.f32.gmra.mrb[0].mxu0 %v451
  %v519 = vpop.f32.mrb[0].mxu0
  %v520 = vadd.f32 0.0, %v519
  %v521 = vpop.f32.mrb[0].mxu0
  %522 = vdwg.mxu0
  %523 = vrot.lane.b32.xlu0 %v213, 64
  %v524 = vpop.permute.xlu0 %523
  %525 = vrot.lane.b32.xlu0 %v284, 64
  %v526 = vpop.permute.xlu0 %525
  %v527 = vsel %vm359, %v524, 0
  %v529 = vsel %vm359, %v526, 0
  %531 = vmatprep.subr.mxu0 0.0
  %532 = vmatpush1.xpose.msra.mxu0 %v529
  %533 = vmatprep.subr.mxu0 0.0
  %534 = vmatpush1.xpose.msra.mxu0 0.0
  %535 = vmatprep.subr.mxu0 0.0
  %536 = vmatpush1.xpose.msra.mxu0 0.0
  %537 = vmatprep.subr.mxu0 0.0
  %538 = vmatpush1.xpose.msra.mxu0 0.0
  %539 = vmatprep.subr.mxu0 0.0
  %540 = vmatpush1.xpose.msra.mxu0 0.0
  %541 = vmatprep.subr.mxu0 0.0
  %542 = vmatpush1.xpose.msra.mxu0 0.0
  %543 = vmatprep.subr.mxu0 0.0
  %544 = vmatpush1.xpose.msra.mxu0 0.0
  %545 = vmatprep.subr.mxu0 0.0
  %546 = vmatpush1.xpose.msra.mxu0 0.0
  %547 = vmatprep.subr.mxu0 0.0
  %548 = vmatpush1.xpose.msra.mxu0 0.0
  %549 = vmatprep.subr.mxu0 0.0
  %550 = vmatpush1.xpose.msra.mxu0 0.0
  %551 = vmatprep.subr.mxu0 0.0
  %552 = vmatpush1.xpose.msra.mxu0 0.0
  %553 = vmatprep.subr.mxu0 0.0
  %554 = vmatpush1.xpose.msra.mxu0 0.0
  %555 = vmatprep.subr.mxu0 0.0
  %556 = vmatpush1.xpose.msra.mxu0 0.0
  %557 = vmatprep.subr.mxu0 0.0
  %558 = vmatpush1.xpose.msra.mxu0 0.0
  %559 = vmatprep.subr.mxu0 0.0
  %560 = vmatpush1.xpose.msra.mxu0 0.0
  %561 = vmatprep.subr.mxu0 0.0
  %562 = vmatpush1.xpose.msra.mxu0 0.0
  %563 = vmatprep.subr.mxu0 0.0
  %564 = vmatpush1.xpose.msra.mxu0 0.0
  %565 = vmatprep.subr.mxu0 0.0
  %566 = vmatpush1.xpose.msra.mxu0 0.0
  %567 = vmatprep.subr.mxu0 0.0
  %568 = vmatpush1.xpose.msra.mxu0 0.0
  %569 = vmatprep.subr.mxu0 0.0
  %570 = vmatpush1.xpose.msra.mxu0 0.0
  %571 = vmatprep.subr.mxu0 0.0
  %572 = vmatpush1.xpose.msra.mxu0 0.0
  %573 = vmatprep.subr.mxu0 0.0
  %574 = vmatpush1.xpose.msra.mxu0 0.0
  %575 = vmatprep.subr.mxu0 0.0
  %576 = vmatpush1.xpose.msra.mxu0 0.0
  %577 = vmatprep.subr.mxu0 0.0
  %578 = vmatpush1.xpose.msra.mxu0 0.0
  %579 = vmatprep.subr.mxu0 0.0
  %580 = vmatpush1.xpose.msra.mxu0 0.0
  %581 = vmatprep.subr.mxu0 0.0
  %582 = vmatpush1.xpose.msra.mxu0 0.0
  %583 = vmatprep.subr.mxu0 0.0
  %584 = vmatpush1.xpose.msra.mxu0 0.0
  %585 = vmatprep.subr.mxu0 0.0
  %586 = vmatpush1.xpose.msra.mxu0 0.0
  %587 = vmatprep.subr.mxu0 0.0
  %588 = vmatpush1.xpose.msra.mxu0 0.0
  %589 = vmatprep.subr.mxu0 0.0
  %590 = vmatpush1.xpose.msra.mxu0 0.0
  %591 = vmatprep.subr.mxu0 0.0
  %592 = vmatpush1.xpose.msra.mxu0 0.0
  %593 = vmatprep.subr.mxu0 0.0
  %594 = vmatpush1.xpose.msra.mxu0 0.0
  %595 = vmatprep.mubr.f32.mxu0 0.0
  %596 = vmatmul.mubr.f32.gmra.mrb[0].mxu0 %v527
  %v597 = vpop.f32.mrb[0].mxu0
  %v598 = vadd.f32 0.0, %v597
  %v599 = vpop.f32.mrb[0].mxu0
  %600 = vdwg.mxu0
  %s601 = scalar_lea.vmem %s1, 8
  %v602 = vld [vmem:[%s601] sm:$0xff]
  %v603 = vadd.f32 %v602, %v598
  %v604 = vsel %vm438, %v603, -inf
  %605 = vmax.xlane.f32.xlu0 %v604
  %v606 = vpop.xlane.xlu0 %605
  %v607 = vsub.f32 %v603, %v606
  %v608 = vmul.f32 %v607, 1.442695
  %v609 = vpow.pop %v608
  %v610 = vsel %vm438, %v609, 0.0
  %611 = vadd.xlane.f32.xlu0 %v610
  %v612 = vpop.xlane.xlu0 %611
  %v613 = vrcp.pop %v612
  %v614 = vmul.f32 %v609, %v613
  %616 = vrot.lane.b32.xlu0 %v355, 64
  %v617 = vpop.permute.xlu0 %616
  %v620 = vsel %vm438, %v614, 0
  %622 = vmatprep.subr.mxu0 0.0
  %623 = vmatpush1.msra.mxu0 %v617
  %624 = vmatprep.subr.mxu0 0.0
  %625 = vmatpush1.msra.mxu0 0.0
  %626 = vmatprep.subr.mxu0 0.0
  %627 = vmatpush1.msra.mxu0 0.0
  %628 = vmatprep.subr.mxu0 0.0
  %629 = vmatpush1.msra.mxu0 0.0
  %630 = vmatprep.subr.mxu0 0.0
  %631 = vmatpush1.msra.mxu0 0.0
  %632 = vmatprep.subr.mxu0 0.0
  %633 = vmatpush1.msra.mxu0 0.0
  %634 = vmatprep.subr.mxu0 0.0
  %635 = vmatpush1.msra.mxu0 0.0
  %636 = vmatprep.subr.mxu0 0.0
  %637 = vmatpush1.msra.mxu0 0.0
  %638 = vmatprep.subr.mxu0 0.0
  %639 = vmatpush1.msra.mxu0 0.0
  %640 = vmatprep.subr.mxu0 0.0
  %641 = vmatpush1.msra.mxu0 0.0
  %642 = vmatprep.subr.mxu0 0.0
  %643 = vmatpush1.msra.mxu0 0.0
  %644 = vmatprep.subr.mxu0 0.0
  %645 = vmatpush1.msra.mxu0 0.0
  %646 = vmatprep.subr.mxu0 0.0
  %647 = vmatpush1.msra.mxu0 0.0
  %648 = vmatprep.subr.mxu0 0.0
  %649 = vmatpush1.msra.mxu0 0.0
  %650 = vmatprep.subr.mxu0 0.0
  %651 = vmatpush1.msra.mxu0 0.0
  %652 = vmatprep.subr.mxu0 0.0
  %653 = vmatpush1.msra.mxu0 0.0
  %654 = vmatprep.subr.mxu0 0.0
  %655 = vmatpush1.msra.mxu0 0.0
  %656 = vmatprep.subr.mxu0 0.0
  %657 = vmatpush1.msra.mxu0 0.0
  %658 = vmatprep.subr.mxu0 0.0
  %659 = vmatpush1.msra.mxu0 0.0
  %660 = vmatprep.subr.mxu0 0.0
  %661 = vmatpush1.msra.mxu0 0.0
  %662 = vmatprep.subr.mxu0 0.0
  %663 = vmatpush1.msra.mxu0 0.0
  %664 = vmatprep.subr.mxu0 0.0
  %665 = vmatpush1.msra.mxu0 0.0
  %666 = vmatprep.subr.mxu0 0.0
  %667 = vmatpush1.msra.mxu0 0.0
  %668 = vmatprep.subr.mxu0 0.0
  %669 = vmatpush1.msra.mxu0 0.0
  %670 = vmatprep.subr.mxu0 0.0
  %671 = vmatpush1.msra.mxu0 0.0
  %672 = vmatprep.subr.mxu0 0.0
  %673 = vmatpush1.msra.mxu0 0.0
  %674 = vmatprep.subr.mxu0 0.0
  %675 = vmatpush1.msra.mxu0 0.0
  %676 = vmatprep.subr.mxu0 0.0
  %677 = vmatpush1.msra.mxu0 0.0
  %678 = vmatprep.subr.mxu0 0.0
  %679 = vmatpush1.msra.mxu0 0.0
  %680 = vmatprep.subr.mxu0 0.0
  %681 = vmatpush1.msra.mxu0 0.0
  %682 = vmatprep.subr.mxu0 0.0
  %683 = vmatpush1.msra.mxu0 0.0
  %684 = vmatprep.subr.mxu0 0.0
  %685 = vmatpush1.msra.mxu0 0.0
  %686 = vmatprep.mubr.f32.mxu0 0.0
  %687 = vmatmul.mubr.f32.gmra.mrb[0].mxu0 %v620
  %v688 = vpop.f32.mrb[0].mxu0
  %v689 = vadd.f32 0.0, %v688
  %v690 = vpop.f32.mrb[0].mxu0
  %691 = vdwg.mxu0
  %v693 = vsel %vm359, %v215, 0
  %v696 = vsel %vm359, %v286, 0
  %698 = vmatprep.subr.mxu0 0.0
  %699 = vmatpush1.xpose.msra.mxu0 %v696
  %700 = vmatprep.subr.mxu0 0.0
  %701 = vmatpush1.xpose.msra.mxu0 0.0
  %702 = vmatprep.subr.mxu0 0.0
  %703 = vmatpush1.xpose.msra.mxu0 0.0
  %704 = vmatprep.subr.mxu0 0.0
  %705 = vmatpush1.xpose.msra.mxu0 0.0
  %706 = vmatprep.subr.mxu0 0.0
  %707 = vmatpush1.xpose.msra.mxu0 0.0
  %708 = vmatprep.subr.mxu0 0.0
  %709 = vmatpush1.xpose.msra.mxu0 0.0
  %710 = vmatprep.subr.mxu0 0.0
  %711 = vmatpush1.xpose.msra.mxu0 0.0
  %712 = vmatprep.subr.mxu0 0.0
  %713 = vmatpush1.xpose.msra.mxu0 0.0
  %714 = vmatprep.subr.mxu0 0.0
  %715 = vmatpush1.xpose.msra.mxu0 0.0
  %716 = vmatprep.subr.mxu0 0.0
  %717 = vmatpush1.xpose.msra.mxu0 0.0
  %718 = vmatprep.subr.mxu0 0.0
  %719 = vmatpush1.xpose.msra.mxu0 0.0
  %720 = vmatprep.subr.mxu0 0.0
  %721 = vmatpush1.xpose.msra.mxu0 0.0
  %722 = vmatprep.subr.mxu0 0.0
  %723 = vmatpush1.xpose.msra.mxu0 0.0
  %724 = vmatprep.subr.mxu0 0.0
  %725 = vmatpush1.xpose.msra.mxu0 0.0
  %726 = vmatprep.subr.mxu0 0.0
  %727 = vmatpush1.xpose.msra.mxu0 0.0
  %728 = vmatprep.subr.mxu0 0.0
  %729 = vmatpush1.xpose.msra.mxu0 0.0
  %730 = vmatprep.subr.mxu0 0.0
  %731 = vmatpush1.xpose.msra.mxu0 0.0
  %732 = vmatprep.subr.mxu0 0.0
  %733 = vmatpush1.xpose.msra.mxu0 0.0
  %734 = vmatprep.subr.mxu0 0.0
  %735 = vmatpush1.xpose.msra.mxu0 0.0
  %736 = vmatprep.subr.mxu0 0.0
  %737 = vmatpush1.xpose.msra.mxu0 0.0
  %738 = vmatprep.subr.mxu0 0.0
  %739 = vmatpush1.xpose.msra.mxu0 0.0
  %740 = vmatprep.subr.mxu0 0.0
  %741 = vmatpush1.xpose.msra.mxu0 0.0
  %742 = vmatprep.subr.mxu0 0.0
  %743 = vmatpush1.xpose.msra.mxu0 0.0
  %744 = vmatprep.subr.mxu0 0.0
  %745 = vmatpush1.xpose.msra.mxu0 0.0
  %746 = vmatprep.subr.mxu0 0.0
  %747 = vmatpush1.xpose.msra.mxu0 0.0
  %748 = vmatprep.subr.mxu0 0.0
  %749 = vmatpush1.xpose.msra.mxu0 0.0
  %750 = vmatprep.subr.mxu0 0.0
  %751 = vmatpush1.xpose.msra.mxu0 0.0
  %752 = vmatprep.subr.mxu0 0.0
  %753 = vmatpush1.xpose.msra.mxu0 0.0
  %754 = vmatprep.subr.mxu0 0.0
  %755 = vmatpush1.xpose.msra.mxu0 0.0
  %756 = vmatprep.subr.mxu0 0.0
  %757 = vmatpush1.xpose.msra.mxu0 0.0
  %758 = vmatprep.subr.mxu0 0.0
  %759 = vmatpush1.xpose.msra.mxu0 0.0
  %760 = vmatprep.subr.mxu0 0.0
  %761 = vmatpush1.xpose.msra.mxu0 0.0
  %762 = vmatprep.mubr.f32.mxu0 0.0
  %763 = vmatmul.mubr.f32.gmra.mrb[0].mxu0 %v693
  %v764 = vpop.f32.mrb[0].mxu0
  %v765 = vadd.f32 0.0, %v764
  %v766 = vpop.f32.mrb[0].mxu0
  %767 = vdwg.mxu0
  %s768 = scalar_lea.vmem %s1, 16
  %v769 = vld [vmem:[%s768] sm:$0xff]
  %v770 = vadd.f32 %v769, %v765
  %v771 = vsel %vm438, %v770, -inf
  %772 = vmax.xlane.f32.xlu0 %v771
  %v773 = vpop.xlane.xlu0 %772
  %v774 = vsub.f32 %v770, %v773
  %v775 = vmul.f32 %v774, 1.442695
  %v776 = vpow.pop %v775
  %v777 = vsel %vm438, %v776, 0.0
  %778 = vadd.xlane.f32.xlu0 %v777
  %v779 = vpop.xlane.xlu0 %778
  %v780 = vrcp.pop %v779
  %v781 = vmul.f32 %v776, %v780
  %v783 = vsel %vm438, %v781, 0
  %785 = vmatprep.subr.mxu0 0.0
  %786 = vmatpush1.msra.mxu0 %v357
  %787 = vmatprep.subr.mxu0 0.0
  %788 = vmatpush1.msra.mxu0 0.0
  %789 = vmatprep.subr.mxu0 0.0
  %790 = vmatpush1.msra.mxu0 0.0
  %791 = vmatprep.subr.mxu0 0.0
  %792 = vmatpush1.msra.mxu0 0.0
  %793 = vmatprep.subr.mxu0 0.0
  %794 = vmatpush1.msra.mxu0 0.0
  %795 = vmatprep.subr.mxu0 0.0
  %796 = vmatpush1.msra.mxu0 0.0
  %797 = vmatprep.subr.mxu0 0.0
  %798 = vmatpush1.msra.mxu0 0.0
  %799 = vmatprep.subr.mxu0 0.0
  %800 = vmatpush1.msra.mxu0 0.0
  %801 = vmatprep.subr.mxu0 0.0
  %802 = vmatpush1.msra.mxu0 0.0
  %803 = vmatprep.subr.mxu0 0.0
  %804 = vmatpush1.msra.mxu0 0.0
  %805 = vmatprep.subr.mxu0 0.0
  %806 = vmatpush1.msra.mxu0 0.0
  %807 = vmatprep.subr.mxu0 0.0
  %808 = vmatpush1.msra.mxu0 0.0
  %809 = vmatprep.subr.mxu0 0.0
  %810 = vmatpush1.msra.mxu0 0.0
  %811 = vmatprep.subr.mxu0 0.0
  %812 = vmatpush1.msra.mxu0 0.0
  %813 = vmatprep.subr.mxu0 0.0
  %814 = vmatpush1.msra.mxu0 0.0
  %815 = vmatprep.subr.mxu0 0.0
  %816 = vmatpush1.msra.mxu0 0.0
  %817 = vmatprep.subr.mxu0 0.0
  %818 = vmatpush1.msra.mxu0 0.0
  %819 = vmatprep.subr.mxu0 0.0
  %820 = vmatpush1.msra.mxu0 0.0
  %821 = vmatprep.subr.mxu0 0.0
  %822 = vmatpush1.msra.mxu0 0.0
  %823 = vmatprep.subr.mxu0 0.0
  %824 = vmatpush1.msra.mxu0 0.0
  %825 = vmatprep.subr.mxu0 0.0
  %826 = vmatpush1.msra.mxu0 0.0
  %827 = vmatprep.subr.mxu0 0.0
  %828 = vmatpush1.msra.mxu0 0.0
  %829 = vmatprep.subr.mxu0 0.0
  %830 = vmatpush1.msra.mxu0 0.0
  %831 = vmatprep.subr.mxu0 0.0
  %832 = vmatpush1.msra.mxu0 0.0
  %833 = vmatprep.subr.mxu0 0.0
  %834 = vmatpush1.msra.mxu0 0.0
  %835 = vmatprep.subr.mxu0 0.0
  %836 = vmatpush1.msra.mxu0 0.0
  %837 = vmatprep.subr.mxu0 0.0
  %838 = vmatpush1.msra.mxu0 0.0
  %839 = vmatprep.subr.mxu0 0.0
  %840 = vmatpush1.msra.mxu0 0.0
  %841 = vmatprep.subr.mxu0 0.0
  %842 = vmatpush1.msra.mxu0 0.0
  %843 = vmatprep.subr.mxu0 0.0
  %844 = vmatpush1.msra.mxu0 0.0
  %845 = vmatprep.subr.mxu0 0.0
  %846 = vmatpush1.msra.mxu0 0.0
  %847 = vmatprep.subr.mxu0 0.0
  %848 = vmatpush1.msra.mxu0 0.0
  %849 = vmatprep.mubr.f32.mxu0 0.0
  %850 = vmatmul.mubr.f32.gmra.mrb[0].mxu0 %v783
  %v851 = vpop.f32.mrb[0].mxu0
  %v852 = vadd.f32 0.0, %v851
  %v853 = vpop.f32.mrb[0].mxu0
  %854 = vdwg.mxu0
  %855 = vrot.lane.b32.xlu0 %v215, 64
  %v856 = vpop.permute.xlu0 %855
  %857 = vrot.lane.b32.xlu0 %v286, 64
  %v858 = vpop.permute.xlu0 %857
  %v859 = vsel %vm359, %v856, 0
  %v861 = vsel %vm359, %v858, 0
  %863 = vmatprep.subr.mxu0 0.0
  %864 = vmatpush1.xpose.msra.mxu0 %v861
  %865 = vmatprep.subr.mxu0 0.0
  %866 = vmatpush1.xpose.msra.mxu0 0.0
  %867 = vmatprep.subr.mxu0 0.0
  %868 = vmatpush1.xpose.msra.mxu0 0.0
  %869 = vmatprep.subr.mxu0 0.0
  %870 = vmatpush1.xpose.msra.mxu0 0.0
  %871 = vmatprep.subr.mxu0 0.0
  %872 = vmatpush1.xpose.msra.mxu0 0.0
  %873 = vmatprep.subr.mxu0 0.0
  %874 = vmatpush1.xpose.msra.mxu0 0.0
  %875 = vmatprep.subr.mxu0 0.0
  %876 = vmatpush1.xpose.msra.mxu0 0.0
  %877 = vmatprep.subr.mxu0 0.0
  %878 = vmatpush1.xpose.msra.mxu0 0.0
  %879 = vmatprep.subr.mxu0 0.0
  %880 = vmatpush1.xpose.msra.mxu0 0.0
  %881 = vmatprep.subr.mxu0 0.0
  %882 = vmatpush1.xpose.msra.mxu0 0.0
  %883 = vmatprep.subr.mxu0 0.0
  %884 = vmatpush1.xpose.msra.mxu0 0.0
  %885 = vmatprep.subr.mxu0 0.0
  %886 = vmatpush1.xpose.msra.mxu0 0.0
  %887 = vmatprep.subr.mxu0 0.0
  %888 = vmatpush1.xpose.msra.mxu0 0.0
  %889 = vmatprep.subr.mxu0 0.0
  %890 = vmatpush1.xpose.msra.mxu0 0.0
  %891 = vmatprep.subr.mxu0 0.0
  %892 = vmatpush1.xpose.msra.mxu0 0.0
  %893 = vmatprep.subr.mxu0 0.0
  %894 = vmatpush1.xpose.msra.mxu0 0.0
  %895 = vmatprep.subr.mxu0 0.0
  %896 = vmatpush1.xpose.msra.mxu0 0.0
  %897 = vmatprep.subr.mxu0 0.0
  %898 = vmatpush1.xpose.msra.mxu0 0.0
  %899 = vmatprep.subr.mxu0 0.0
  %900 = vmatpush1.xpose.msra.mxu0 0.0
  %901 = vmatprep.subr.mxu0 0.0
  %902 = vmatpush1.xpose.msra.mxu0 0.0
  %903 = vmatprep.subr.mxu0 0.0
  %904 = vmatpush1.xpose.msra.mxu0 0.0
  %905 = vmatprep.subr.mxu0 0.0
  %906 = vmatpush1.xpose.msra.mxu0 0.0
  %907 = vmatprep.subr.mxu0 0.0
  %908 = vmatpush1.xpose.msra.mxu0 0.0
  %909 = vmatprep.subr.mxu0 0.0
  %910 = vmatpush1.xpose.msra.mxu0 0.0
  %911 = vmatprep.subr.mxu0 0.0
  %912 = vmatpush1.xpose.msra.mxu0 0.0
  %913 = vmatprep.subr.mxu0 0.0
  %914 = vmatpush1.xpose.msra.mxu0 0.0
  %915 = vmatprep.subr.mxu0 0.0
  %916 = vmatpush1.xpose.msra.mxu0 0.0
  %917 = vmatprep.subr.mxu0 0.0
  %918 = vmatpush1.xpose.msra.mxu0 0.0
  %919 = vmatprep.subr.mxu0 0.0
  %920 = vmatpush1.xpose.msra.mxu0 0.0
  %921 = vmatprep.subr.mxu0 0.0
  %922 = vmatpush1.xpose.msra.mxu0 0.0
  %923 = vmatprep.subr.mxu0 0.0
  %924 = vmatpush1.xpose.msra.mxu0 0.0
  %925 = vmatprep.subr.mxu0 0.0
  %926 = vmatpush1.xpose.msra.mxu0 0.0
  %927 = vmatprep.mubr.f32.mxu0 0.0
  %928 = vmatmul.mubr.f32.gmra.mrb[0].mxu0 %v859
  %v929 = vpop.f32.mrb[0].mxu0
  %v930 = vadd.f32 0.0, %v929
  %v931 = vpop.f32.mrb[0].mxu0
  %932 = vdwg.mxu0
  %s933 = scalar_lea.vmem %s1, 24
  %v934 = vld [vmem:[%s933] sm:$0xff]
  %v935 = vadd.f32 %v934, %v930
  %v936 = vsel %vm438, %v935, -inf
  %937 = vmax.xlane.f32.xlu0 %v936
  %v938 = vpop.xlane.xlu0 %937
  %v939 = vsub.f32 %v935, %v938
  %v940 = vmul.f32 %v939, 1.442695
  %v941 = vpow.pop %v940
  %v942 = vsel %vm438, %v941, 0.0
  %943 = vadd.xlane.f32.xlu0 %v942
  %v944 = vpop.xlane.xlu0 %943
  %v945 = vrcp.pop %v944
  %v946 = vmul.f32 %v941, %v945
  %948 = vrot.lane.b32.xlu0 %v357, 64
  %v949 = vpop.permute.xlu0 %948
  %v952 = vsel %vm438, %v946, 0
  %954 = vmatprep.subr.mxu0 0.0
  %955 = vmatpush1.msra.mxu0 %v949
  %956 = vmatprep.subr.mxu0 0.0
  %957 = vmatpush1.msra.mxu0 0.0
  %958 = vmatprep.subr.mxu0 0.0
  %959 = vmatpush1.msra.mxu0 0.0
  %960 = vmatprep.subr.mxu0 0.0
  %961 = vmatpush1.msra.mxu0 0.0
  %962 = vmatprep.subr.mxu0 0.0
  %963 = vmatpush1.msra.mxu0 0.0
  %964 = vmatprep.subr.mxu0 0.0
  %965 = vmatpush1.msra.mxu0 0.0
  %966 = vmatprep.subr.mxu0 0.0
  %967 = vmatpush1.msra.mxu0 0.0
  %968 = vmatprep.subr.mxu0 0.0
  %969 = vmatpush1.msra.mxu0 0.0
  %970 = vmatprep.subr.mxu0 0.0
  %971 = vmatpush1.msra.mxu0 0.0
  %972 = vmatprep.subr.mxu0 0.0
  %973 = vmatpush1.msra.mxu0 0.0
  %974 = vmatprep.subr.mxu0 0.0
  %975 = vmatpush1.msra.mxu0 0.0
  %976 = vmatprep.subr.mxu0 0.0
  %977 = vmatpush1.msra.mxu0 0.0
  %978 = vmatprep.subr.mxu0 0.0
  %979 = vmatpush1.msra.mxu0 0.0
  %980 = vmatprep.subr.mxu0 0.0
  %981 = vmatpush1.msra.mxu0 0.0
  %982 = vmatprep.subr.mxu0 0.0
  %983 = vmatpush1.msra.mxu0 0.0
  %984 = vmatprep.subr.mxu0 0.0
  %985 = vmatpush1.msra.mxu0 0.0
  %986 = vmatprep.subr.mxu0 0.0
  %987 = vmatpush1.msra.mxu0 0.0
  %988 = vmatprep.subr.mxu0 0.0
  %989 = vmatpush1.msra.mxu0 0.0
  %990 = vmatprep.subr.mxu0 0.0
  %991 = vmatpush1.msra.mxu0 0.0
  %992 = vmatprep.subr.mxu0 0.0
  %993 = vmatpush1.msra.mxu0 0.0
  %994 = vmatprep.subr.mxu0 0.0
  %995 = vmatpush1.msra.mxu0 0.0
  %996 = vmatprep.subr.mxu0 0.0
  %997 = vmatpush1.msra.mxu0 0.0
  %998 = vmatprep.subr.mxu0 0.0
  %999 = vmatpush1.msra.mxu0 0.0
  %1000 = vmatprep.subr.mxu0 0.0
  %1001 = vmatpush1.msra.mxu0 0.0
  %1002 = vmatprep.subr.mxu0 0.0
  %1003 = vmatpush1.msra.mxu0 0.0
  %1004 = vmatprep.subr.mxu0 0.0
  %1005 = vmatpush1.msra.mxu0 0.0
  %1006 = vmatprep.subr.mxu0 0.0
  %1007 = vmatpush1.msra.mxu0 0.0
  %1008 = vmatprep.subr.mxu0 0.0
  %1009 = vmatpush1.msra.mxu0 0.0
  %1010 = vmatprep.subr.mxu0 0.0
  %1011 = vmatpush1.msra.mxu0 0.0
  %1012 = vmatprep.subr.mxu0 0.0
  %1013 = vmatpush1.msra.mxu0 0.0
  %1014 = vmatprep.subr.mxu0 0.0
  %1015 = vmatpush1.msra.mxu0 0.0
  %1016 = vmatprep.subr.mxu0 0.0
  %1017 = vmatpush1.msra.mxu0 0.0
  %1018 = vmatprep.mubr.f32.mxu0 0.0
  %1019 = vmatmul.mubr.f32.gmra.mrb[0].mxu0 %v952
  %v1020 = vpop.f32.mrb[0].mxu0
  %v1021 = vadd.f32 0.0, %v1020
  %v1022 = vpop.f32.mrb[0].mxu0
  %1023 = vdwg.mxu0
  %1025 = vrot.lane.b32.xlu0 %v689, 64
  %v1026 = vpop.permute.xlu0 %1025
  %1029 = vrot.lane.b32.xlu0 %v1021, 64
  %v1030 = vpop.permute.xlu0 %1029
  %v1032 = vsel %vm359, %v520, %v1026
  %v1033 = vsel %vm359, %v852, %v1030
  %1034 = vst [vmem:[%s4] sm:$0xff] %v1032
  %1035 = vst [vmem:[%s4 + $0x8] sm:$0xff] %v1033
  // Predicated region
  $region18: #{relation_unit_forward_batched.1} parent=0 // pred_check
    _
  $region19: #{relation_unit_forward_batched.1} parent=0 // pred_check_branch
    %1037 = sbr.rel (0) target = $region21
  $region20: #{relation_unit_forward_batched.1} parent=0 // pred_region
    _
  $region21: #{relation_unit_forward_batched.1} parent=0 // pred_fallthru
    _
  // Predicated region
  $region22: #{relation_unit_forward_batched.1} parent=0 // pred_check
    _
  $region23: #{relation_unit_forward_batched.1} parent=0 // pred_check_branch
    %1039 = sbr.rel (0) target = $region25
  $region24: #{relation_unit_forward_batched.1} parent=0 // pred_region
    _
  $region25: #{relation_unit_forward_batched.1} parent=0 // pred_fallthru
    _

</llo_original>
